<compile_context>
chip_gen: v7x
topology: tpu7x:2x2x1
jax: 0.10.0
libtpu: 0.0.40
codegen_flags: <defaults>
</compile_context>

<pallas_src>
import jax
import jax.numpy as jnp
from jax import lax
from jax.experimental import pallas as pl
from jax.experimental.pallas import tpu as pltpu

CLS_PAD = 128  # lane-dense classifier width (real classes live in [:, :10])


def rnn_classify_kernel(tok_ref, eproj_ref, whh_ref, wcls_ref, bcls_ref, out_ref):
    # tok_ref:   (T*B, 1) int32  time-major flattened token ids
    # eproj_ref: (V, D)          pre-projected embedding table E_proj = Emb @ W_ih^T
    # whh_ref:   (D, D)          W_hh^T
    # wcls_ref:  (D, CLS_PAD)    W_cls^T zero-padded to 128 lanes
    # bcls_ref:  (1, CLS_PAD)    b_cls, padded lanes = -1e30 (masks softmax)
    # out_ref:   (B, CLS_PAD)    softmax probabilities (lane-dense)
    TB = tok_ref.shape[0]
    B = out_ref.shape[0]
    T = TB // B
    V, D = eproj_ref.shape

    # Gather + input-project ALL timesteps in one MXU pass (one-hot matmul);
    # this sits outside the serial recurrence critical path.
    tok = tok_ref[...]                                               # (T*B, 1)
    onehot = (tok == lax.broadcasted_iota(jnp.int32, (TB, V), 1)).astype(jnp.float32)
    xp = jnp.dot(onehot, eproj_ref[...],
                 preferred_element_type=jnp.float32)                 # (T*B, D)

    whh = whh_ref[...]                                               # (D, D)

    # t = 0: h_0 = 0, so h_1 = tanh(x_0 @ W_ih^T) — skip the h @ W_hh matmul.
    h = jnp.tanh(xp[0:B, :])

    # Serial recurrence, fully unrolled (T is static; slices are 8-sublane aligned).
    for t in range(1, T):
        x_t = xp[t * B:(t + 1) * B, :]                               # (B, D)
        h = jnp.tanh(jnp.dot(h, whh, preferred_element_type=jnp.float32) + x_t)

    # Classifier + softmax, lane-dense (padded logits sit at -1e30 -> prob 0).
    logits = (jnp.dot(h, wcls_ref[...], preferred_element_type=jnp.float32)
              + bcls_ref[...])                                       # (B, 128)
    m = jnp.max(logits, axis=1, keepdims=True)
    e = jnp.exp(logits - m)
    out_ref[...] = e * pl.reciprocal(jnp.sum(e, axis=1, keepdims=True), approx=True)


@jax.jit
def torch_model_forward(tokens, emb_table, w_ih, w_hh, w_cls, b_cls):
    """tokens: (B, T) int32.  Returns softmax probabilities (B, 10)."""
    B, T = tokens.shape
    V, D = emb_table.shape
    C = w_cls.shape[0]

    # Fold embedding lookup + input projection: E_proj[v] = Emb[v] @ W_ih^T.
    # (Row 0 of Emb is zero -> row 0 of E_proj is zero: padding_idx preserved.)
    e_proj = jnp.dot(emb_table, w_ih.T)                              # (V, D)
    whh_t = w_hh.T                                                   # (D, D)

    # Lane-dense classifier: pad to 128 output columns, mask via -1e30 bias.
    wcls_pad = jnp.zeros((D, CLS_PAD), jnp.float32).at[:, :C].set(w_cls.T)
    bcls_pad = jnp.full((1, CLS_PAD), -1e30, jnp.float32).at[0, :C].set(b_cls)

    # Tokens time-major-flattened (tiny int transpose; no heavy float transpose
    # or gather exists outside the kernel anymore).
    tok_tm = jnp.transpose(tokens).reshape(T * B, 1).astype(jnp.int32)

    vmem = pl.BlockSpec(memory_space=pltpu.MemorySpace.VMEM)
    out_pad = pl.pallas_call(
        rnn_classify_kernel,
        out_shape=jax.ShapeDtypeStruct((B, CLS_PAD), jnp.float32),
        in_specs=[vmem, vmem, vmem, vmem, vmem],
        out_specs=vmem,
    )(tok_tm, e_proj, whh_t, wcls_pad, bcls_pad)
    return out_pad[:, :C]


if __name__ == "__main__":
    # Small shapes consistent with the module
    vocab_size = 30          # len(vocab)
    vector_dim = 32          # embedding / hidden dim
    sentence_length = 8      # T
    batch = 8                # B
    num_classes = 10

    key = jax.random.PRNGKey(0)
    k_emb, k_ih, k_hh, k_cw, k_cb, k_tok = jax.random.split(key, 6)

    emb_table = 0.1 * jax.random.normal(k_emb, (vocab_size, vector_dim), jnp.float32)
    emb_table = emb_table.at[0].set(0.0)  # padding_idx=0
    w_ih = 0.1 * jax.random.normal(k_ih, (vector_dim, vector_dim), jnp.float32)   # (hidden, input)
    w_hh = 0.1 * jax.random.normal(k_hh, (vector_dim, vector_dim), jnp.float32)   # (hidden, hidden)
    w_cls = 0.1 * jax.random.normal(k_cw, (num_classes, vector_dim), jnp.float32) # (out, in)
    b_cls = 0.1 * jax.random.normal(k_cb, (num_classes,), jnp.float32)

    tokens = jax.random.randint(k_tok, (batch, sentence_length), 0, vocab_size, jnp.int32)

    probs = torch_model_forward(tokens, emb_table, w_ih, w_hh, w_cls, b_cls)
    probs = jax.block_until_ready(probs)

    # Pure-JAX reference of the same forward pass.
    x_emb = emb_table[tokens]                                 # (B, T, D)
    def rnn_step(h, x_t):
        h = jnp.tanh(x_t @ w_ih.T + h @ w_hh.T)
        return h, h
    h0 = jnp.zeros((batch, vector_dim), jnp.float32)
    h_last, _ = lax.scan(rnn_step, h0, jnp.transpose(x_emb, (1, 0, 2)))
    probs_ref = jax.nn.softmax(h_last @ w_cls.T + b_cls, axis=1)

    assert probs.shape == (batch, num_classes)
    assert jnp.allclose(jnp.sum(probs, axis=1), 1.0, atol=5e-3)      # approx recip tolerance
    assert jnp.allclose(probs, probs_ref, atol=5e-3)

    # TODO(synk): CrossEntropyLoss training branch (y is not None) not implemented;
    # only the inference softmax path is translated.
    print("KERNEL_OK")
</pallas_src>

<mosaic_0001>
module attributes {stable_mosaic.version = 11 : i64} {
  func.func @rnn_classify_kernel(%arg0: memref<64x1xi32, #tpu.memory_space<vmem>>, %arg1: memref<30x32xf32, #tpu.memory_space<vmem>>, %arg2: memref<32x32xf32, #tpu.memory_space<vmem>>, %arg3: memref<32x128xf32, #tpu.memory_space<vmem>>, %arg4: memref<1x128xf32, #tpu.memory_space<vmem>>, %arg5: memref<8x128xf32, #tpu.memory_space<vmem>>) attributes {dimension_semantics = [], scalar_prefetch = 0 : i64, scratch_operands = 0 : i64, tpu.core_type = #tpu.core_type<tc>} {
    %c0 = arith.constant 0 : index
    %c0_0 = arith.constant 0 : index
    %0 = vector.load %arg0[%c0, %c0_0] : memref<64x1xi32, #tpu.memory_space<vmem>>, vector<64x1xi32>
    %1 = tpu.iota {dimensions = array<i32: 1>} : vector<64x30xi32>
    %2 = vector.broadcast %0 : vector<64x1xi32> to vector<64x30xi32>
    %3 = arith.cmpi eq, %2, %1 : vector<64x30xi32>
    %4 = arith.extui %3 : vector<64x30xi1> to vector<64x30xi32>
    %5 = arith.sitofp %4 : vector<64x30xi32> to vector<64x30xf32>
    %c0_1 = arith.constant 0 : index
    %c0_2 = arith.constant 0 : index
    %6 = vector.load %arg1[%c0_1, %c0_2] : memref<30x32xf32, #tpu.memory_space<vmem>>, vector<30x32xf32>
    %cst = arith.constant dense<0.000000e+00> : vector<64x32xf32>
    %7 = tpu.matmul %5, %6, %cst {dimension_numbers = #tpu.dot_dimension_numbers<[1], [0], [0], [1], [0, 0, 1, 1], [], []>} : vector<64x30xf32>, vector<30x32xf32>, vector<64x32xf32> -> vector<64x32xf32>
    %c0_3 = arith.constant 0 : index
    %c0_4 = arith.constant 0 : index
    %8 = vector.load %arg2[%c0_3, %c0_4] : memref<32x32xf32, #tpu.memory_space<vmem>>, vector<32x32xf32>
    %9 = vector.extract_strided_slice %7 {offsets = [0, 0], sizes = [8, 32], strides = [1, 1]} : vector<64x32xf32> to vector<8x32xf32>
    %10 = math.tanh %9 : vector<8x32xf32>
    %11 = vector.extract_strided_slice %7 {offsets = [8, 0], sizes = [8, 32], strides = [1, 1]} : vector<64x32xf32> to vector<8x32xf32>
    %cst_5 = arith.constant dense<0.000000e+00> : vector<8x32xf32>
    %12 = tpu.matmul %10, %8, %cst_5 {dimension_numbers = #tpu.dot_dimension_numbers<[1], [0], [0], [1], [0, 0, 1, 1], [], []>} : vector<8x32xf32>, vector<32x32xf32>, vector<8x32xf32> -> vector<8x32xf32>
    %13 = arith.addf %12, %11 : vector<8x32xf32>
    %14 = math.tanh %13 : vector<8x32xf32>
    %15 = vector.extract_strided_slice %7 {offsets = [16, 0], sizes = [8, 32], strides = [1, 1]} : vector<64x32xf32> to vector<8x32xf32>
    %cst_6 = arith.constant dense<0.000000e+00> : vector<8x32xf32>
    %16 = tpu.matmul %14, %8, %cst_6 {dimension_numbers = #tpu.dot_dimension_numbers<[1], [0], [0], [1], [0, 0, 1, 1], [], []>} : vector<8x32xf32>, vector<32x32xf32>, vector<8x32xf32> -> vector<8x32xf32>
    %17 = arith.addf %16, %15 : vector<8x32xf32>
    %18 = math.tanh %17 : vector<8x32xf32>
    %19 = vector.extract_strided_slice %7 {offsets = [24, 0], sizes = [8, 32], strides = [1, 1]} : vector<64x32xf32> to vector<8x32xf32>
    %cst_7 = arith.constant dense<0.000000e+00> : vector<8x32xf32>
    %20 = tpu.matmul %18, %8, %cst_7 {dimension_numbers = #tpu.dot_dimension_numbers<[1], [0], [0], [1], [0, 0, 1, 1], [], []>} : vector<8x32xf32>, vector<32x32xf32>, vector<8x32xf32> -> vector<8x32xf32>
    %21 = arith.addf %20, %19 : vector<8x32xf32>
    %22 = math.tanh %21 : vector<8x32xf32>
    %23 = vector.extract_strided_slice %7 {offsets = [32, 0], sizes = [8, 32], strides = [1, 1]} : vector<64x32xf32> to vector<8x32xf32>
    %cst_8 = arith.constant dense<0.000000e+00> : vector<8x32xf32>
    %24 = tpu.matmul %22, %8, %cst_8 {dimension_numbers = #tpu.dot_dimension_numbers<[1], [0], [0], [1], [0, 0, 1, 1], [], []>} : vector<8x32xf32>, vector<32x32xf32>, vector<8x32xf32> -> vector<8x32xf32>
    %25 = arith.addf %24, %23 : vector<8x32xf32>
    %26 = math.tanh %25 : vector<8x32xf32>
    %27 = vector.extract_strided_slice %7 {offsets = [40, 0], sizes = [8, 32], strides = [1, 1]} : vector<64x32xf32> to vector<8x32xf32>
    %cst_9 = arith.constant dense<0.000000e+00> : vector<8x32xf32>
    %28 = tpu.matmul %26, %8, %cst_9 {dimension_numbers = #tpu.dot_dimension_numbers<[1], [0], [0], [1], [0, 0, 1, 1], [], []>} : vector<8x32xf32>, vector<32x32xf32>, vector<8x32xf32> -> vector<8x32xf32>
    %29 = arith.addf %28, %27 : vector<8x32xf32>
    %30 = math.tanh %29 : vector<8x32xf32>
    %31 = vector.extract_strided_slice %7 {offsets = [48, 0], sizes = [8, 32], strides = [1, 1]} : vector<64x32xf32> to vector<8x32xf32>
    %cst_10 = arith.constant dense<0.000000e+00> : vector<8x32xf32>
    %32 = tpu.matmul %30, %8, %cst_10 {dimension_numbers = #tpu.dot_dimension_numbers<[1], [0], [0], [1], [0, 0, 1, 1], [], []>} : vector<8x32xf32>, vector<32x32xf32>, vector<8x32xf32> -> vector<8x32xf32>
    %33 = arith.addf %32, %31 : vector<8x32xf32>
    %34 = math.tanh %33 : vector<8x32xf32>
    %35 = vector.extract_strided_slice %7 {offsets = [56, 0], sizes = [8, 32], strides = [1, 1]} : vector<64x32xf32> to vector<8x32xf32>
    %cst_11 = arith.constant dense<0.000000e+00> : vector<8x32xf32>
    %36 = tpu.matmul %34, %8, %cst_11 {dimension_numbers = #tpu.dot_dimension_numbers<[1], [0], [0], [1], [0, 0, 1, 1], [], []>} : vector<8x32xf32>, vector<32x32xf32>, vector<8x32xf32> -> vector<8x32xf32>
    %37 = arith.addf %36, %35 : vector<8x32xf32>
    %38 = math.tanh %37 : vector<8x32xf32>
    %c0_12 = arith.constant 0 : index
    %c0_13 = arith.constant 0 : index
    %39 = vector.load %arg3[%c0_12, %c0_13] : memref<32x128xf32, #tpu.memory_space<vmem>>, vector<32x128xf32>
    %cst_14 = arith.constant dense<0.000000e+00> : vector<8x128xf32>
    %40 = tpu.matmul %38, %39, %cst_14 {dimension_numbers = #tpu.dot_dimension_numbers<[1], [0], [0], [1], [0, 0, 1, 1], [], []>} : vector<8x32xf32>, vector<32x128xf32>, vector<8x128xf32> -> vector<8x128xf32>
    %c0_15 = arith.constant 0 : index
    %c0_16 = arith.constant 0 : index
    %41 = vector.load %arg4[%c0_15, %c0_16] : memref<1x128xf32, #tpu.memory_space<vmem>>, vector<1x128xf32>
    %42 = vector.broadcast %41 : vector<1x128xf32> to vector<8x128xf32>
    %43 = arith.addf %40, %42 : vector<8x128xf32>
    %cst_17 = arith.constant dense<0xFF800000> : vector<8xf32>
    %44 = vector.multi_reduction <maximumf>, %43, %cst_17 [1] : vector<8x128xf32> to vector<8xf32>
    %45 = vector.shape_cast %44 : vector<8xf32> to vector<8x1xf32>
    %46 = vector.broadcast %45 : vector<8x1xf32> to vector<8x128xf32>
    %47 = arith.subf %43, %46 : vector<8x128xf32>
    %48 = math.exp %47 : vector<8x128xf32>
    %cst_18 = arith.constant dense<0.000000e+00> : vector<8xf32>
    %49 = vector.multi_reduction <add>, %48, %cst_18 [1] : vector<8x128xf32> to vector<8xf32>
    %50 = vector.shape_cast %49 : vector<8xf32> to vector<8x1xf32>
    %51 = tpu.reciprocal %50 {approx = true} : vector<8x1xf32> -> vector<8x1xf32>
    %52 = vector.broadcast %51 : vector<8x1xf32> to vector<8x128xf32>
    %53 = arith.mulf %48, %52 : vector<8x128xf32>
    %c0_19 = arith.constant 0 : index
    %c0_20 = arith.constant 0 : index
    %54 = vector.load %arg5[%c0_19, %c0_20] : memref<8x128xf32, #tpu.memory_space<vmem>>, vector<8x128xf32>
    tpu.vector_store %arg5[%c0_19, %c0_20], %53 {strides = array<i32>} : memref<8x128xf32, #tpu.memory_space<vmem>>, vector<8x128xf32>,
    return
  }
}

</mosaic_0001>

<llo_original>
// kernel: torch_model_forward.1
$region0: #{torch_model_forward.1}
  #allocation0 [shape = 'u32[]', space=smem, size = 0x4, offset = 0x4, fixed_abs, tag = 'smem constant byte address 0x4 - core index']
  #allocation1 [shape = 'u32[144,128]{1,0:T(1,128)}', space=vmem, size = 0x12000, scoped, tag = 'internal scratch']
  %s0 = inlined_call_operand.vmem [shape: s32[64,1], index: 0, kind: input, shape index: {}]
  %s1 = inlined_call_operand.vmem [shape: f32[30,32], index: 1, kind: input, shape index: {}]
  %s2 = inlined_call_operand.vmem [shape: f32[32,32], index: 2, kind: input, shape index: {}]
  %s3 = inlined_call_operand.vmem [shape: f32[32,128], index: 3, kind: input, shape index: {}]
  %s4 = inlined_call_operand.vmem [shape: f32[1,128], index: 4, kind: input, shape index: {}]
  %s5 = inlined_call_operand.hbm [shape: f32[8,128], index: 5, kind: output, shape index: {}]
  %s6 = sld [smem:[#allocation0]]
  $region30: #{torch_model_forward.1} parent=0
    _
  %s8 = ssub.s32 1, %s6
  %s9 = scalar_select 0, %s8, %s6
  $region1: #{torch_model_forward.1} parent=0
    #allocation2 [shape = 'u8[4096]{0}', space=vmem, size = 0x1000, scoped, tag = 'output window, operand 0, single buffered']
    #allocation3 [shape = 's32[1]{0}', space=sflag, size = 0x4, scoped, tag = 'scoped memory for torch_model_forward.1']
    %10 = vsyncpa [#allocation3], 0
    // Predicated region
    $region2: #{torch_model_forward.1} parent=1 // pred_check
      _
    $region3: #{torch_model_forward.1} parent=1 // pred_check_branch
      %12 = sbr.rel (0) target = $region5
    $region4: #{torch_model_forward.1} parent=1 // pred_region
      _
    $region5: #{torch_model_forward.1} parent=1 // pred_fallthru
      _
    // Predicated region
    $region6: #{torch_model_forward.1} parent=1 // pred_check
      _
    $region7: #{torch_model_forward.1} parent=1 // pred_check_branch
      %14 = sbr.rel (0) target = $region9
    $region8: #{torch_model_forward.1} parent=1 // pred_region
      _
    $region9: #{torch_model_forward.1} parent=1 // pred_fallthru
      _
    // Predicated region
    $region10: #{torch_model_forward.1} parent=1 // pred_check
      _
    $region11: #{torch_model_forward.1} parent=1 // pred_check_branch
      %16 = sbr.rel (0) target = $region13
    $region12: #{torch_model_forward.1} parent=1 // pred_region
      _
    $region13: #{torch_model_forward.1} parent=1 // pred_fallthru
      _
    // Predicated region
    $region14: #{torch_model_forward.1} parent=1 // pred_check
      _
    $region15: #{torch_model_forward.1} parent=1 // pred_check_branch
      %18 = sbr.rel (0) target = $region17
    $region16: #{torch_model_forward.1} parent=1 // pred_region
      _
    $region17: #{torch_model_forward.1} parent=1 // pred_fallthru
      _
    // Predicated region
    $region18: #{torch_model_forward.1} parent=1 // pred_check
      _
    $region19: #{torch_model_forward.1} parent=1 // pred_check_branch
      %20 = sbr.rel (0) target = $region21
    $region20: #{torch_model_forward.1} parent=1 // pred_region
      _
    $region21: #{torch_model_forward.1} parent=1 // pred_fallthru
      _
    %v21 = vld [vmem:[%s0] sm:$0xff]
    %v22 = vld [vmem:[%s0 + $0x8] sm:$0xff]
    %v23 = vld [vmem:[%s0 + $0x10] sm:$0xff]
    %v24 = vld [vmem:[%s0 + $0x18] sm:$0xff]
    %v25 = vld [vmem:[%s0 + $0x20] sm:$0xff]
    %v26 = vld [vmem:[%s0 + $0x28] sm:$0xff]
    %v27 = vld [vmem:[%s0 + $0x30] sm:$0xff]
    %v28 = vld [vmem:[%s0 + $0x38] sm:$0xff]
    %v29 = vlaneseq
    %v30 = vand.u32 %v29, 127
    %31 = vset.pattern.permute.xlu0 0
    %32 = vperm.xlu0 %31, %v21
    %v33 = vpop.permute.xlu0 %32
    %34 = vset.pattern.permute.xlu0 0
    %35 = vperm.xlu0 %34, %v22
    %v36 = vpop.permute.xlu0 %35
    %37 = vset.pattern.permute.xlu0 0
    %38 = vperm.xlu0 %37, %v23
    %v39 = vpop.permute.xlu0 %38
    %40 = vset.pattern.permute.xlu0 0
    %41 = vperm.xlu0 %40, %v24
    %v42 = vpop.permute.xlu0 %41
    %43 = vset.pattern.permute.xlu0 0
    %44 = vperm.xlu0 %43, %v25
    %v45 = vpop.permute.xlu0 %44
    %46 = vset.pattern.permute.xlu0 0
    %47 = vperm.xlu0 %46, %v26
    %v48 = vpop.permute.xlu0 %47
    %49 = vset.pattern.permute.xlu0 0
    %50 = vperm.xlu0 %49, %v27
    %v51 = vpop.permute.xlu0 %50
    %52 = vset.pattern.permute.xlu0 0
    %53 = vperm.xlu0 %52, %v28
    %v54 = vpop.permute.xlu0 %53
    %vm55 = vcmp.eq.s32.totalorder %v33, %v30
    %vm56 = vcmp.eq.s32.totalorder %v36, %v30
    %vm57 = vcmp.eq.s32.totalorder %v39, %v30
    %vm58 = vcmp.eq.s32.totalorder %v42, %v30
    %vm59 = vcmp.eq.s32.totalorder %v45, %v30
    %vm60 = vcmp.eq.s32.totalorder %v48, %v30
    %vm61 = vcmp.eq.s32.totalorder %v51, %v30
    %vm62 = vcmp.eq.s32.totalorder %v54, %v30
    %v63 = vsel %vm55, 1, 0
    %v64 = vsel %vm56, 1, 0
    %v65 = vsel %vm57, 1, 0
    %v66 = vsel %vm58, 1, 0
    %v67 = vsel %vm59, 1, 0
    %v68 = vsel %vm60, 1, 0
    %v69 = vsel %vm61, 1, 0
    %v70 = vsel %vm62, 1, 0
    %v71 = vcvt.s32.f32 %v63
    %v72 = vcvt.s32.f32 %v64
    %v73 = vcvt.s32.f32 %v65
    %v74 = vcvt.s32.f32 %v66
    %v75 = vcvt.s32.f32 %v67
    %v76 = vcvt.s32.f32 %v68
    %v77 = vcvt.s32.f32 %v69
    %v78 = vcvt.s32.f32 %v70
    %v79 = vld [vmem:[%s1] sm:$0xff]
    %v80 = vld [vmem:[%s1 + $0x8] sm:$0xff]
    %v81 = vld [vmem:[%s1 + $0x10] sm:$0xff]
    %v82 = vld [vmem:[%s1 + $0x18] sm:$0x3f]
    %vm83 = vcmask 244736
    %v85 = vsel %vm83, %v71, 0
    %v88 = vsel %vm83, %v72, 0
    %v91 = vsel %vm83, %v73, 0
    %v94 = vsel %vm83, %v74, 0
    %v97 = vsel %vm83, %v75, 0
    %v100 = vsel %vm83, %v76, 0
    %v103 = vsel %vm83, %v77, 0
    %v106 = vsel %vm83, %v78, 0
    %vm108 = vcmask 1045504
    %v110 = vsel %vm108, %v82, 0
    %112 = vmatprep.subr.mxu0 0.0
    %113 = vmatpush1.msra.mxu0 %v79
    %114 = vmatprep.subr.mxu0 0.0
    %115 = vmatpush1.msra.mxu0 %v80
    %116 = vmatprep.subr.mxu0 0.0
    %117 = vmatpush1.msra.mxu0 %v81
    %118 = vmatprep.subr.mxu0 0.0
    %119 = vmatpush1.msra.mxu0 %v110
    %120 = vmatprep.subr.mxu0 0.0
    %121 = vmatpush1.msra.mxu0 0.0
    %122 = vmatprep.subr.mxu0 0.0
    %123 = vmatpush1.msra.mxu0 0.0
    %124 = vmatprep.subr.mxu0 0.0
    %125 = vmatpush1.msra.mxu0 0.0
    %126 = vmatprep.subr.mxu0 0.0
    %127 = vmatpush1.msra.mxu0 0.0
    %128 = vmatprep.subr.mxu0 0.0
    %129 = vmatpush1.msra.mxu0 0.0
    %130 = vmatprep.subr.mxu0 0.0
    %131 = vmatpush1.msra.mxu0 0.0
    %132 = vmatprep.subr.mxu0 0.0
    %133 = vmatpush1.msra.mxu0 0.0
    %134 = vmatprep.subr.mxu0 0.0
    %135 = vmatpush1.msra.mxu0 0.0
    %136 = vmatprep.subr.mxu0 0.0
    %137 = vmatpush1.msra.mxu0 0.0
    %138 = vmatprep.subr.mxu0 0.0
    %139 = vmatpush1.msra.mxu0 0.0
    %140 = vmatprep.subr.mxu0 0.0
    %141 = vmatpush1.msra.mxu0 0.0
    %142 = vmatprep.subr.mxu0 0.0
    %143 = vmatpush1.msra.mxu0 0.0
    %144 = vmatprep.subr.mxu0 0.0
    %145 = vmatpush1.msra.mxu0 0.0
    %146 = vmatprep.subr.mxu0 0.0
    %147 = vmatpush1.msra.mxu0 0.0
    %148 = vmatprep.subr.mxu0 0.0
    %149 = vmatpush1.msra.mxu0 0.0
    %150 = vmatprep.subr.mxu0 0.0
    %151 = vmatpush1.msra.mxu0 0.0
    %152 = vmatprep.subr.mxu0 0.0
    %153 = vmatpush1.msra.mxu0 0.0
    %154 = vmatprep.subr.mxu0 0.0
    %155 = vmatpush1.msra.mxu0 0.0
    %156 = vmatprep.subr.mxu0 0.0
    %157 = vmatpush1.msra.mxu0 0.0
    %158 = vmatprep.subr.mxu0 0.0
    %159 = vmatpush1.msra.mxu0 0.0
    %160 = vmatprep.subr.mxu0 0.0
    %161 = vmatpush1.msra.mxu0 0.0
    %162 = vmatprep.subr.mxu0 0.0
    %163 = vmatpush1.msra.mxu0 0.0
    %164 = vmatprep.subr.mxu0 0.0
    %165 = vmatpush1.msra.mxu0 0.0
    %166 = vmatprep.subr.mxu0 0.0
    %167 = vmatpush1.msra.mxu0 0.0
    %168 = vmatprep.subr.mxu0 0.0
    %169 = vmatpush1.msra.mxu0 0.0
    %170 = vmatprep.subr.mxu0 0.0
    %171 = vmatpush1.msra.mxu0 0.0
    %172 = vmatprep.subr.mxu0 0.0
    %173 = vmatpush1.msra.mxu0 0.0
    %174 = vmatprep.subr.mxu0 0.0
    %175 = vmatpush1.msra.mxu0 0.0
    %176 = vmatprep.mubr.f32.mxu0 0.0
    %177 = vmatmul.mubr.f32.gmra.mrb[0].mxu0 %v85
    %v178 = vpop.f32.mrb[0].mxu0
    %v179 = vadd.f32 0.0, %v178
    %v180 = vpop.f32.mrb[0].mxu0
    %181 = vmatprep.mubr.f32.mxu0 0.0
    %182 = vmatmul.mubr.f32.gmra.mrb[0].mxu0 %v88
    %v183 = vpop.f32.mrb[0].mxu0
    %v184 = vadd.f32 0.0, %v183
    %v185 = vpop.f32.mrb[0].mxu0
    %186 = vmatprep.mubr.f32.mxu0 0.0
    %187 = vmatmul.mubr.f32.gmra.mrb[0].mxu0 %v91
    %v188 = vpop.f32.mrb[0].mxu0
    %v189 = vadd.f32 0.0, %v188
    %v190 = vpop.f32.mrb[0].mxu0
    %191 = vmatprep.mubr.f32.mxu0 0.0
    %192 = vmatmul.mubr.f32.gmra.mrb[0].mxu0 %v94
    %v193 = vpop.f32.mrb[0].mxu0
    %v194 = vadd.f32 0.0, %v193
    %v195 = vpop.f32.mrb[0].mxu0
    %196 = vmatprep.mubr.f32.mxu0 0.0
    %197 = vmatmul.mubr.f32.gmra.mrb[0].mxu0 %v97
    %v198 = vpop.f32.mrb[0].mxu0
    %v199 = vadd.f32 0.0, %v198
    %v200 = vpop.f32.mrb[0].mxu0
    %201 = vmatprep.mubr.f32.mxu0 0.0
    %202 = vmatmul.mubr.f32.gmra.mrb[0].mxu0 %v100
    %v203 = vpop.f32.mrb[0].mxu0
    %v204 = vadd.f32 0.0, %v203
    %v205 = vpop.f32.mrb[0].mxu0
    %206 = vmatprep.mubr.f32.mxu0 0.0
    %207 = vmatmul.mubr.f32.gmra.mrb[0].mxu0 %v103
    %v208 = vpop.f32.mrb[0].mxu0
    %v209 = vadd.f32 0.0, %v208
    %v210 = vpop.f32.mrb[0].mxu0
    %211 = vmatprep.mubr.f32.mxu0 0.0
    %212 = vmatmul.mubr.f32.gmra.mrb[0].mxu0 %v106
    %v213 = vpop.f32.mrb[0].mxu0
    %v214 = vadd.f32 0.0, %v213
    %v215 = vpop.f32.mrb[0].mxu0
    %216 = vdwg.mxu0
    %v217 = vld [vmem:[%s2] sm:$0xff]
    %v218 = vld [vmem:[%s2 + $0x8] sm:$0xff]
    %v219 = vld [vmem:[%s2 + $0x10] sm:$0xff]
    %v220 = vld [vmem:[%s2 + $0x18] sm:$0xff]
    %v221 = vtanh.pop %v179
    %vm222 = vcmask 261120
    %v224 = vsel %vm222, %v221, 0
    %226 = vmatprep.subr.mxu0 0.0
    %227 = vmatpush1.msra.mxu0 %v217
    %228 = vmatprep.subr.mxu0 0.0
    %229 = vmatpush1.msra.mxu0 %v218
    %230 = vmatprep.subr.mxu0 0.0
    %231 = vmatpush1.msra.mxu0 %v219
    %232 = vmatprep.subr.mxu0 0.0
    %233 = vmatpush1.msra.mxu0 %v220
    %234 = vmatprep.subr.mxu0 0.0
    %235 = vmatpush1.msra.mxu0 0.0
    %236 = vmatprep.subr.mxu0 0.0
    %237 = vmatpush1.msra.mxu0 0.0
    %238 = vmatprep.subr.mxu0 0.0
    %239 = vmatpush1.msra.mxu0 0.0
    %240 = vmatprep.subr.mxu0 0.0
    %241 = vmatpush1.msra.mxu0 0.0
    %242 = vmatprep.subr.mxu0 0.0
    %243 = vmatpush1.msra.mxu0 0.0
    %244 = vmatprep.subr.mxu0 0.0
    %245 = vmatpush1.msra.mxu0 0.0
    %246 = vmatprep.subr.mxu0 0.0
    %247 = vmatpush1.msra.mxu0 0.0
    %248 = vmatprep.subr.mxu0 0.0
    %249 = vmatpush1.msra.mxu0 0.0
    %250 = vmatprep.subr.mxu0 0.0
    %251 = vmatpush1.msra.mxu0 0.0
    %252 = vmatprep.subr.mxu0 0.0
    %253 = vmatpush1.msra.mxu0 0.0
    %254 = vmatprep.subr.mxu0 0.0
    %255 = vmatpush1.msra.mxu0 0.0
    %256 = vmatprep.subr.mxu0 0.0
    %257 = vmatpush1.msra.mxu0 0.0
    %258 = vmatprep.subr.mxu0 0.0
    %259 = vmatpush1.msra.mxu0 0.0
    %260 = vmatprep.subr.mxu0 0.0
    %261 = vmatpush1.msra.mxu0 0.0
    %262 = vmatprep.subr.mxu0 0.0
    %263 = vmatpush1.msra.mxu0 0.0
    %264 = vmatprep.subr.mxu0 0.0
    %265 = vmatpush1.msra.mxu0 0.0
    %266 = vmatprep.subr.mxu0 0.0
    %267 = vmatpush1.msra.mxu0 0.0
    %268 = vmatprep.subr.mxu0 0.0
    %269 = vmatpush1.msra.mxu0 0.0
    %270 = vmatprep.subr.mxu0 0.0
    %271 = vmatpush1.msra.mxu0 0.0
    %272 = vmatprep.subr.mxu0 0.0
    %273 = vmatpush1.msra.mxu0 0.0
    %274 = vmatprep.subr.mxu0 0.0
    %275 = vmatpush1.msra.mxu0 0.0
    %276 = vmatprep.subr.mxu0 0.0
    %277 = vmatpush1.msra.mxu0 0.0
    %278 = vmatprep.subr.mxu0 0.0
    %279 = vmatpush1.msra.mxu0 0.0
    %280 = vmatprep.subr.mxu0 0.0
    %281 = vmatpush1.msra.mxu0 0.0
    %282 = vmatprep.subr.mxu0 0.0
    %283 = vmatpush1.msra.mxu0 0.0
    %284 = vmatprep.subr.mxu0 0.0
    %285 = vmatpush1.msra.mxu0 0.0
    %286 = vmatprep.subr.mxu0 0.0
    %287 = vmatpush1.msra.mxu0 0.0
    %288 = vmatprep.subr.mxu0 0.0
    %289 = vmatpush1.msra.mxu0 0.0
    %290 = vmatprep.mubr.f32.mxu0 0.0
    %291 = vmatmul.mubr.f32.gmra.mrb[0].mxu0 %v224
    %v292 = vpop.f32.mrb[0].mxu0
    %v293 = vadd.f32 %v184, %v292
    %v294 = vpop.f32.mrb[0].mxu0
    %295 = vdwg.mxu0
    %v296 = vtanh.pop %v293
    %v298 = vsel %vm222, %v296, 0
    %300 = vmatprep.subr.mxu0 0.0
    %301 = vmatpush1.msra.mxu0 %v217
    %302 = vmatprep.subr.mxu0 0.0
    %303 = vmatpush1.msra.mxu0 %v218
    %304 = vmatprep.subr.mxu0 0.0
    %305 = vmatpush1.msra.mxu0 %v219
    %306 = vmatprep.subr.mxu0 0.0
    %307 = vmatpush1.msra.mxu0 %v220
    %308 = vmatprep.subr.mxu0 0.0
    %309 = vmatpush1.msra.mxu0 0.0
    %310 = vmatprep.subr.mxu0 0.0
    %311 = vmatpush1.msra.mxu0 0.0
    %312 = vmatprep.subr.mxu0 0.0
    %313 = vmatpush1.msra.mxu0 0.0
    %314 = vmatprep.subr.mxu0 0.0
    %315 = vmatpush1.msra.mxu0 0.0
    %316 = vmatprep.subr.mxu0 0.0
    %317 = vmatpush1.msra.mxu0 0.0
    %318 = vmatprep.subr.mxu0 0.0
    %319 = vmatpush1.msra.mxu0 0.0
    %320 = vmatprep.subr.mxu0 0.0
    %321 = vmatpush1.msra.mxu0 0.0
    %322 = vmatprep.subr.mxu0 0.0
    %323 = vmatpush1.msra.mxu0 0.0
    %324 = vmatprep.subr.mxu0 0.0
    %325 = vmatpush1.msra.mxu0 0.0
    %326 = vmatprep.subr.mxu0 0.0
    %327 = vmatpush1.msra.mxu0 0.0
    %328 = vmatprep.subr.mxu0 0.0
    %329 = vmatpush1.msra.mxu0 0.0
    %330 = vmatprep.subr.mxu0 0.0
    %331 = vmatpush1.msra.mxu0 0.0
    %332 = vmatprep.subr.mxu0 0.0
    %333 = vmatpush1.msra.mxu0 0.0
    %334 = vmatprep.subr.mxu0 0.0
    %335 = vmatpush1.msra.mxu0 0.0
    %336 = vmatprep.subr.mxu0 0.0
    %337 = vmatpush1.msra.mxu0 0.0
    %338 = vmatprep.subr.mxu0 0.0
    %339 = vmatpush1.msra.mxu0 0.0
    %340 = vmatprep.subr.mxu0 0.0
    %341 = vmatpush1.msra.mxu0 0.0
    %342 = vmatprep.subr.mxu0 0.0
    %343 = vmatpush1.msra.mxu0 0.0
    %344 = vmatprep.subr.mxu0 0.0
    %345 = vmatpush1.msra.mxu0 0.0
    %346 = vmatprep.subr.mxu0 0.0
    %347 = vmatpush1.msra.mxu0 0.0
    %348 = vmatprep.subr.mxu0 0.0
    %349 = vmatpush1.msra.mxu0 0.0
    %350 = vmatprep.subr.mxu0 0.0
    %351 = vmatpush1.msra.mxu0 0.0
    %352 = vmatprep.subr.mxu0 0.0
    %353 = vmatpush1.msra.mxu0 0.0
    %354 = vmatprep.subr.mxu0 0.0
    %355 = vmatpush1.msra.mxu0 0.0
    %356 = vmatprep.subr.mxu0 0.0
    %357 = vmatpush1.msra.mxu0 0.0
    %358 = vmatprep.subr.mxu0 0.0
    %359 = vmatpush1.msra.mxu0 0.0
    %360 = vmatprep.subr.mxu0 0.0
    %361 = vmatpush1.msra.mxu0 0.0
    %362 = vmatprep.subr.mxu0 0.0
    %363 = vmatpush1.msra.mxu0 0.0
    %364 = vmatprep.mubr.f32.mxu0 0.0
    %365 = vmatmul.mubr.f32.gmra.mrb[0].mxu0 %v298
    %v366 = vpop.f32.mrb[0].mxu0
    %v367 = vadd.f32 %v189, %v366
    %v368 = vpop.f32.mrb[0].mxu0
    %369 = vdwg.mxu0
    %v370 = vtanh.pop %v367
    %v372 = vsel %vm222, %v370, 0
    %374 = vmatprep.subr.mxu0 0.0
    %375 = vmatpush1.msra.mxu0 %v217
    %376 = vmatprep.subr.mxu0 0.0
    %377 = vmatpush1.msra.mxu0 %v218
    %378 = vmatprep.subr.mxu0 0.0
    %379 = vmatpush1.msra.mxu0 %v219
    %380 = vmatprep.subr.mxu0 0.0
    %381 = vmatpush1.msra.mxu0 %v220
    %382 = vmatprep.subr.mxu0 0.0
    %383 = vmatpush1.msra.mxu0 0.0
    %384 = vmatprep.subr.mxu0 0.0
    %385 = vmatpush1.msra.mxu0 0.0
    %386 = vmatprep.subr.mxu0 0.0
    %387 = vmatpush1.msra.mxu0 0.0
    %388 = vmatprep.subr.mxu0 0.0
    %389 = vmatpush1.msra.mxu0 0.0
    %390 = vmatprep.subr.mxu0 0.0
    %391 = vmatpush1.msra.mxu0 0.0
    %392 = vmatprep.subr.mxu0 0.0
    %393 = vmatpush1.msra.mxu0 0.0
    %394 = vmatprep.subr.mxu0 0.0
    %395 = vmatpush1.msra.mxu0 0.0
    %396 = vmatprep.subr.mxu0 0.0
    %397 = vmatpush1.msra.mxu0 0.0
    %398 = vmatprep.subr.mxu0 0.0
    %399 = vmatpush1.msra.mxu0 0.0
    %400 = vmatprep.subr.mxu0 0.0
    %401 = vmatpush1.msra.mxu0 0.0
    %402 = vmatprep.subr.mxu0 0.0
    %403 = vmatpush1.msra.mxu0 0.0
    %404 = vmatprep.subr.mxu0 0.0
    %405 = vmatpush1.msra.mxu0 0.0
    %406 = vmatprep.subr.mxu0 0.0
    %407 = vmatpush1.msra.mxu0 0.0
    %408 = vmatprep.subr.mxu0 0.0
    %409 = vmatpush1.msra.mxu0 0.0
    %410 = vmatprep.subr.mxu0 0.0
    %411 = vmatpush1.msra.mxu0 0.0
    %412 = vmatprep.subr.mxu0 0.0
    %413 = vmatpush1.msra.mxu0 0.0
    %414 = vmatprep.subr.mxu0 0.0
    %415 = vmatpush1.msra.mxu0 0.0
    %416 = vmatprep.subr.mxu0 0.0
    %417 = vmatpush1.msra.mxu0 0.0
    %418 = vmatprep.subr.mxu0 0.0
    %419 = vmatpush1.msra.mxu0 0.0
    %420 = vmatprep.subr.mxu0 0.0
    %421 = vmatpush1.msra.mxu0 0.0
    %422 = vmatprep.subr.mxu0 0.0
    %423 = vmatpush1.msra.mxu0 0.0
    %424 = vmatprep.subr.mxu0 0.0
    %425 = vmatpush1.msra.mxu0 0.0
    %426 = vmatprep.subr.mxu0 0.0
    %427 = vmatpush1.msra.mxu0 0.0
    %428 = vmatprep.subr.mxu0 0.0
    %429 = vmatpush1.msra.mxu0 0.0
    %430 = vmatprep.subr.mxu0 0.0
    %431 = vmatpush1.msra.mxu0 0.0
    %432 = vmatprep.subr.mxu0 0.0
    %433 = vmatpush1.msra.mxu0 0.0
    %434 = vmatprep.subr.mxu0 0.0
    %435 = vmatpush1.msra.mxu0 0.0
    %436 = vmatprep.subr.mxu0 0.0
    %437 = vmatpush1.msra.mxu0 0.0
    %438 = vmatprep.mubr.f32.mxu0 0.0
    %439 = vmatmul.mubr.f32.gmra.mrb[0].mxu0 %v372
    %v440 = vpop.f32.mrb[0].mxu0
    %v441 = vadd.f32 %v194, %v440
    %v442 = vpop.f32.mrb[0].mxu0
    %443 = vdwg.mxu0
    %v444 = vtanh.pop %v441
    %v446 = vsel %vm222, %v444, 0
    %448 = vmatprep.subr.mxu0 0.0
    %449 = vmatpush1.msra.mxu0 %v217
    %450 = vmatprep.subr.mxu0 0.0
    %451 = vmatpush1.msra.mxu0 %v218
    %452 = vmatprep.subr.mxu0 0.0
    %453 = vmatpush1.msra.mxu0 %v219
    %454 = vmatprep.subr.mxu0 0.0
    %455 = vmatpush1.msra.mxu0 %v220
    %456 = vmatprep.subr.mxu0 0.0
    %457 = vmatpush1.msra.mxu0 0.0
    %458 = vmatprep.subr.mxu0 0.0
    %459 = vmatpush1.msra.mxu0 0.0
    %460 = vmatprep.subr.mxu0 0.0
    %461 = vmatpush1.msra.mxu0 0.0
    %462 = vmatprep.subr.mxu0 0.0
    %463 = vmatpush1.msra.mxu0 0.0
    %464 = vmatprep.subr.mxu0 0.0
    %465 = vmatpush1.msra.mxu0 0.0
    %466 = vmatprep.subr.mxu0 0.0
    %467 = vmatpush1.msra.mxu0 0.0
    %468 = vmatprep.subr.mxu0 0.0
    %469 = vmatpush1.msra.mxu0 0.0
    %470 = vmatprep.subr.mxu0 0.0
    %471 = vmatpush1.msra.mxu0 0.0
    %472 = vmatprep.subr.mxu0 0.0
    %473 = vmatpush1.msra.mxu0 0.0
    %474 = vmatprep.subr.mxu0 0.0
    %475 = vmatpush1.msra.mxu0 0.0
    %476 = vmatprep.subr.mxu0 0.0
    %477 = vmatpush1.msra.mxu0 0.0
    %478 = vmatprep.subr.mxu0 0.0
    %479 = vmatpush1.msra.mxu0 0.0
    %480 = vmatprep.subr.mxu0 0.0
    %481 = vmatpush1.msra.mxu0 0.0
    %482 = vmatprep.subr.mxu0 0.0
    %483 = vmatpush1.msra.mxu0 0.0
    %484 = vmatprep.subr.mxu0 0.0
    %485 = vmatpush1.msra.mxu0 0.0
    %486 = vmatprep.subr.mxu0 0.0
    %487 = vmatpush1.msra.mxu0 0.0
    %488 = vmatprep.subr.mxu0 0.0
    %489 = vmatpush1.msra.mxu0 0.0
    %490 = vmatprep.subr.mxu0 0.0
    %491 = vmatpush1.msra.mxu0 0.0
    %492 = vmatprep.subr.mxu0 0.0
    %493 = vmatpush1.msra.mxu0 0.0
    %494 = vmatprep.subr.mxu0 0.0
    %495 = vmatpush1.msra.mxu0 0.0
    %496 = vmatprep.subr.mxu0 0.0
    %497 = vmatpush1.msra.mxu0 0.0
    %498 = vmatprep.subr.mxu0 0.0
    %499 = vmatpush1.msra.mxu0 0.0
    %500 = vmatprep.subr.mxu0 0.0
    %501 = vmatpush1.msra.mxu0 0.0
    %502 = vmatprep.subr.mxu0 0.0
    %503 = vmatpush1.msra.mxu0 0.0
    %504 = vmatprep.subr.mxu0 0.0
    %505 = vmatpush1.msra.mxu0 0.0
    %506 = vmatprep.subr.mxu0 0.0
    %507 = vmatpush1.msra.mxu0 0.0
    %508 = vmatprep.subr.mxu0 0.0
    %509 = vmatpush1.msra.mxu0 0.0
    %510 = vmatprep.subr.mxu0 0.0
    %511 = vmatpush1.msra.mxu0 0.0
    %512 = vmatprep.mubr.f32.mxu0 0.0
    %513 = vmatmul.mubr.f32.gmra.mrb[0].mxu0 %v446
    %v514 = vpop.f32.mrb[0].mxu0
    %v515 = vadd.f32 %v199, %v514
    %v516 = vpop.f32.mrb[0].mxu0
    %517 = vdwg.mxu0
    %v518 = vtanh.pop %v515
    %v520 = vsel %vm222, %v518, 0
    %522 = vmatprep.subr.mxu0 0.0
    %523 = vmatpush1.msra.mxu0 %v217
    %524 = vmatprep.subr.mxu0 0.0
    %525 = vmatpush1.msra.mxu0 %v218
    %526 = vmatprep.subr.mxu0 0.0
    %527 = vmatpush1.msra.mxu0 %v219
    %528 = vmatprep.subr.mxu0 0.0
    %529 = vmatpush1.msra.mxu0 %v220
    %530 = vmatprep.subr.mxu0 0.0
    %531 = vmatpush1.msra.mxu0 0.0
    %532 = vmatprep.subr.mxu0 0.0
    %533 = vmatpush1.msra.mxu0 0.0
    %534 = vmatprep.subr.mxu0 0.0
    %535 = vmatpush1.msra.mxu0 0.0
    %536 = vmatprep.subr.mxu0 0.0
    %537 = vmatpush1.msra.mxu0 0.0
    %538 = vmatprep.subr.mxu0 0.0
    %539 = vmatpush1.msra.mxu0 0.0
    %540 = vmatprep.subr.mxu0 0.0
    %541 = vmatpush1.msra.mxu0 0.0
    %542 = vmatprep.subr.mxu0 0.0
    %543 = vmatpush1.msra.mxu0 0.0
    %544 = vmatprep.subr.mxu0 0.0
    %545 = vmatpush1.msra.mxu0 0.0
    %546 = vmatprep.subr.mxu0 0.0
    %547 = vmatpush1.msra.mxu0 0.0
    %548 = vmatprep.subr.mxu0 0.0
    %549 = vmatpush1.msra.mxu0 0.0
    %550 = vmatprep.subr.mxu0 0.0
    %551 = vmatpush1.msra.mxu0 0.0
    %552 = vmatprep.subr.mxu0 0.0
    %553 = vmatpush1.msra.mxu0 0.0
    %554 = vmatprep.subr.mxu0 0.0
    %555 = vmatpush1.msra.mxu0 0.0
    %556 = vmatprep.subr.mxu0 0.0
    %557 = vmatpush1.msra.mxu0 0.0
    %558 = vmatprep.subr.mxu0 0.0
    %559 = vmatpush1.msra.mxu0 0.0
    %560 = vmatprep.subr.mxu0 0.0
    %561 = vmatpush1.msra.mxu0 0.0
    %562 = vmatprep.subr.mxu0 0.0
    %563 = vmatpush1.msra.mxu0 0.0
    %564 = vmatprep.subr.mxu0 0.0
    %565 = vmatpush1.msra.mxu0 0.0
    %566 = vmatprep.subr.mxu0 0.0
    %567 = vmatpush1.msra.mxu0 0.0
    %568 = vmatprep.subr.mxu0 0.0
    %569 = vmatpush1.msra.mxu0 0.0
    %570 = vmatprep.subr.mxu0 0.0
    %571 = vmatpush1.msra.mxu0 0.0
    %572 = vmatprep.subr.mxu0 0.0
    %573 = vmatpush1.msra.mxu0 0.0
    %574 = vmatprep.subr.mxu0 0.0
    %575 = vmatpush1.msra.mxu0 0.0
    %576 = vmatprep.subr.mxu0 0.0
    %577 = vmatpush1.msra.mxu0 0.0
    %578 = vmatprep.subr.mxu0 0.0
    %579 = vmatpush1.msra.mxu0 0.0
    %580 = vmatprep.subr.mxu0 0.0
    %581 = vmatpush1.msra.mxu0 0.0
    %582 = vmatprep.subr.mxu0 0.0
    %583 = vmatpush1.msra.mxu0 0.0
    %584 = vmatprep.subr.mxu0 0.0
    %585 = vmatpush1.msra.mxu0 0.0
    %586 = vmatprep.mubr.f32.mxu0 0.0
    %587 = vmatmul.mubr.f32.gmra.mrb[0].mxu0 %v520
    %v588 = vpop.f32.mrb[0].mxu0
    %v589 = vadd.f32 %v204, %v588
    %v590 = vpop.f32.mrb[0].mxu0
    %591 = vdwg.mxu0
    %v592 = vtanh.pop %v589
    %v594 = vsel %vm222, %v592, 0
    %596 = vmatprep.subr.mxu0 0.0
    %597 = vmatpush1.msra.mxu0 %v217
    %598 = vmatprep.subr.mxu0 0.0
    %599 = vmatpush1.msra.mxu0 %v218
    %600 = vmatprep.subr.mxu0 0.0
    %601 = vmatpush1.msra.mxu0 %v219
    %602 = vmatprep.subr.mxu0 0.0
    %603 = vmatpush1.msra.mxu0 %v220
    %604 = vmatprep.subr.mxu0 0.0
    %605 = vmatpush1.msra.mxu0 0.0
    %606 = vmatprep.subr.mxu0 0.0
    %607 = vmatpush1.msra.mxu0 0.0
    %608 = vmatprep.subr.mxu0 0.0
    %609 = vmatpush1.msra.mxu0 0.0
    %610 = vmatprep.subr.mxu0 0.0
    %611 = vmatpush1.msra.mxu0 0.0
    %612 = vmatprep.subr.mxu0 0.0
    %613 = vmatpush1.msra.mxu0 0.0
    %614 = vmatprep.subr.mxu0 0.0
    %615 = vmatpush1.msra.mxu0 0.0
    %616 = vmatprep.subr.mxu0 0.0
    %617 = vmatpush1.msra.mxu0 0.0
    %618 = vmatprep.subr.mxu0 0.0
    %619 = vmatpush1.msra.mxu0 0.0
    %620 = vmatprep.subr.mxu0 0.0
    %621 = vmatpush1.msra.mxu0 0.0
    %622 = vmatprep.subr.mxu0 0.0
    %623 = vmatpush1.msra.mxu0 0.0
    %624 = vmatprep.subr.mxu0 0.0
    %625 = vmatpush1.msra.mxu0 0.0
    %626 = vmatprep.subr.mxu0 0.0
    %627 = vmatpush1.msra.mxu0 0.0
    %628 = vmatprep.subr.mxu0 0.0
    %629 = vmatpush1.msra.mxu0 0.0
    %630 = vmatprep.subr.mxu0 0.0
    %631 = vmatpush1.msra.mxu0 0.0
    %632 = vmatprep.subr.mxu0 0.0
    %633 = vmatpush1.msra.mxu0 0.0
    %634 = vmatprep.subr.mxu0 0.0
    %635 = vmatpush1.msra.mxu0 0.0
    %636 = vmatprep.subr.mxu0 0.0
    %637 = vmatpush1.msra.mxu0 0.0
    %638 = vmatprep.subr.mxu0 0.0
    %639 = vmatpush1.msra.mxu0 0.0
    %640 = vmatprep.subr.mxu0 0.0
    %641 = vmatpush1.msra.mxu0 0.0
    %642 = vmatprep.subr.mxu0 0.0
    %643 = vmatpush1.msra.mxu0 0.0
    %644 = vmatprep.subr.mxu0 0.0
    %645 = vmatpush1.msra.mxu0 0.0
    %646 = vmatprep.subr.mxu0 0.0
    %647 = vmatpush1.msra.mxu0 0.0
    %648 = vmatprep.subr.mxu0 0.0
    %649 = vmatpush1.msra.mxu0 0.0
    %650 = vmatprep.subr.mxu0 0.0
    %651 = vmatpush1.msra.mxu0 0.0
    %652 = vmatprep.subr.mxu0 0.0
    %653 = vmatpush1.msra.mxu0 0.0
    %654 = vmatprep.subr.mxu0 0.0
    %655 = vmatpush1.msra.mxu0 0.0
    %656 = vmatprep.subr.mxu0 0.0
    %657 = vmatpush1.msra.mxu0 0.0
    %658 = vmatprep.subr.mxu0 0.0
    %659 = vmatpush1.msra.mxu0 0.0
    %660 = vmatprep.mubr.f32.mxu0 0.0
    %661 = vmatmul.mubr.f32.gmra.mrb[0].mxu0 %v594
    %v662 = vpop.f32.mrb[0].mxu0
    %v663 = vadd.f32 %v209, %v662
    %v664 = vpop.f32.mrb[0].mxu0
    %665 = vdwg.mxu0
    %v666 = vtanh.pop %v663
    %v668 = vsel %vm222, %v666, 0
    %670 = vmatprep.subr.mxu0 0.0
    %671 = vmatpush1.msra.mxu0 %v217
    %672 = vmatprep.subr.mxu0 0.0
    %673 = vmatpush1.msra.mxu0 %v218
    %674 = vmatprep.subr.mxu0 0.0
    %675 = vmatpush1.msra.mxu0 %v219
    %676 = vmatprep.subr.mxu0 0.0
    %677 = vmatpush1.msra.mxu0 %v220
    %678 = vmatprep.subr.mxu0 0.0
    %679 = vmatpush1.msra.mxu0 0.0
    %680 = vmatprep.subr.mxu0 0.0
    %681 = vmatpush1.msra.mxu0 0.0
    %682 = vmatprep.subr.mxu0 0.0
    %683 = vmatpush1.msra.mxu0 0.0
    %684 = vmatprep.subr.mxu0 0.0
    %685 = vmatpush1.msra.mxu0 0.0
    %686 = vmatprep.subr.mxu0 0.0
    %687 = vmatpush1.msra.mxu0 0.0
    %688 = vmatprep.subr.mxu0 0.0
    %689 = vmatpush1.msra.mxu0 0.0
    %690 = vmatprep.subr.mxu0 0.0
    %691 = vmatpush1.msra.mxu0 0.0
    %692 = vmatprep.subr.mxu0 0.0
    %693 = vmatpush1.msra.mxu0 0.0
    %694 = vmatprep.subr.mxu0 0.0
    %695 = vmatpush1.msra.mxu0 0.0
    %696 = vmatprep.subr.mxu0 0.0
    %697 = vmatpush1.msra.mxu0 0.0
    %698 = vmatprep.subr.mxu0 0.0
    %699 = vmatpush1.msra.mxu0 0.0
    %700 = vmatprep.subr.mxu0 0.0
    %701 = vmatpush1.msra.mxu0 0.0
    %702 = vmatprep.subr.mxu0 0.0
    %703 = vmatpush1.msra.mxu0 0.0
    %704 = vmatprep.subr.mxu0 0.0
    %705 = vmatpush1.msra.mxu0 0.0
    %706 = vmatprep.subr.mxu0 0.0
    %707 = vmatpush1.msra.mxu0 0.0
    %708 = vmatprep.subr.mxu0 0.0
    %709 = vmatpush1.msra.mxu0 0.0
    %710 = vmatprep.subr.mxu0 0.0
    %711 = vmatpush1.msra.mxu0 0.0
    %712 = vmatprep.subr.mxu0 0.0
    %713 = vmatpush1.msra.mxu0 0.0
    %714 = vmatprep.subr.mxu0 0.0
    %715 = vmatpush1.msra.mxu0 0.0
    %716 = vmatprep.subr.mxu0 0.0
    %717 = vmatpush1.msra.mxu0 0.0
    %718 = vmatprep.subr.mxu0 0.0
    %719 = vmatpush1.msra.mxu0 0.0
    %720 = vmatprep.subr.mxu0 0.0
    %721 = vmatpush1.msra.mxu0 0.0
    %722 = vmatprep.subr.mxu0 0.0
    %723 = vmatpush1.msra.mxu0 0.0
    %724 = vmatprep.subr.mxu0 0.0
    %725 = vmatpush1.msra.mxu0 0.0
    %726 = vmatprep.subr.mxu0 0.0
    %727 = vmatpush1.msra.mxu0 0.0
    %728 = vmatprep.subr.mxu0 0.0
    %729 = vmatpush1.msra.mxu0 0.0
    %730 = vmatprep.subr.mxu0 0.0
    %731 = vmatpush1.msra.mxu0 0.0
    %732 = vmatprep.subr.mxu0 0.0
    %733 = vmatpush1.msra.mxu0 0.0
    %734 = vmatprep.mubr.f32.mxu0 0.0
    %735 = vmatmul.mubr.f32.gmra.mrb[0].mxu0 %v668
    %v736 = vpop.f32.mrb[0].mxu0
    %v737 = vadd.f32 %v214, %v736
    %v738 = vpop.f32.mrb[0].mxu0
    %739 = vdwg.mxu0
    %v740 = vtanh.pop %v737
    %v741 = vld [vmem:[%s3] sm:$0xff]
    %v742 = vld [vmem:[%s3 + $0x8] sm:$0xff]
    %v743 = vld [vmem:[%s3 + $0x10] sm:$0xff]
    %v744 = vld [vmem:[%s3 + $0x18] sm:$0xff]
    %v745 = vld [vmem:[%s4] sm:$0x1]
    %v747 = vlaneseq
    %v748 = vshrl.u32 %v747, 7
    %v749 = vsub.s32 0, %v748
    %v750 = vrot.slane %v745, %v749
    %v753 = vsel %vm222, %v740, 0
    %755 = vmatprep.subr.mxu0 0.0
    %756 = vmatpush1.msra.mxu0 %v741
    %757 = vmatprep.subr.mxu0 0.0
    %758 = vmatpush1.msra.mxu0 %v742
    %759 = vmatprep.subr.mxu0 0.0
    %760 = vmatpush1.msra.mxu0 %v743
    %761 = vmatprep.subr.mxu0 0.0
    %762 = vmatpush1.msra.mxu0 %v744
    %763 = vmatprep.subr.mxu0 0.0
    %764 = vmatpush1.msra.mxu0 0.0
    %765 = vmatprep.subr.mxu0 0.0
    %766 = vmatpush1.msra.mxu0 0.0
    %767 = vmatprep.subr.mxu0 0.0
    %768 = vmatpush1.msra.mxu0 0.0
    %769 = vmatprep.subr.mxu0 0.0
    %770 = vmatpush1.msra.mxu0 0.0
    %771 = vmatprep.subr.mxu0 0.0
    %772 = vmatpush1.msra.mxu0 0.0
    %773 = vmatprep.subr.mxu0 0.0
    %774 = vmatpush1.msra.mxu0 0.0
    %775 = vmatprep.subr.mxu0 0.0
    %776 = vmatpush1.msra.mxu0 0.0
    %777 = vmatprep.subr.mxu0 0.0
    %778 = vmatpush1.msra.mxu0 0.0
    %779 = vmatprep.subr.mxu0 0.0
    %780 = vmatpush1.msra.mxu0 0.0
    %781 = vmatprep.subr.mxu0 0.0
    %782 = vmatpush1.msra.mxu0 0.0
    %783 = vmatprep.subr.mxu0 0.0
    %784 = vmatpush1.msra.mxu0 0.0
    %785 = vmatprep.subr.mxu0 0.0
    %786 = vmatpush1.msra.mxu0 0.0
    %787 = vmatprep.subr.mxu0 0.0
    %788 = vmatpush1.msra.mxu0 0.0
    %789 = vmatprep.subr.mxu0 0.0
    %790 = vmatpush1.msra.mxu0 0.0
    %791 = vmatprep.subr.mxu0 0.0
    %792 = vmatpush1.msra.mxu0 0.0
    %793 = vmatprep.subr.mxu0 0.0
    %794 = vmatpush1.msra.mxu0 0.0
    %795 = vmatprep.subr.mxu0 0.0
    %796 = vmatpush1.msra.mxu0 0.0
    %797 = vmatprep.subr.mxu0 0.0
    %798 = vmatpush1.msra.mxu0 0.0
    %799 = vmatprep.subr.mxu0 0.0
    %800 = vmatpush1.msra.mxu0 0.0
    %801 = vmatprep.subr.mxu0 0.0
    %802 = vmatpush1.msra.mxu0 0.0
    %803 = vmatprep.subr.mxu0 0.0
    %804 = vmatpush1.msra.mxu0 0.0
    %805 = vmatprep.subr.mxu0 0.0
    %806 = vmatpush1.msra.mxu0 0.0
    %807 = vmatprep.subr.mxu0 0.0
    %808 = vmatpush1.msra.mxu0 0.0
    %809 = vmatprep.subr.mxu0 0.0
    %810 = vmatpush1.msra.mxu0 0.0
    %811 = vmatprep.subr.mxu0 0.0
    %812 = vmatpush1.msra.mxu0 0.0
    %813 = vmatprep.subr.mxu0 0.0
    %814 = vmatpush1.msra.mxu0 0.0
    %815 = vmatprep.subr.mxu0 0.0
    %816 = vmatpush1.msra.mxu0 0.0
    %817 = vmatprep.subr.mxu0 0.0
    %818 = vmatpush1.msra.mxu0 0.0
    %819 = vmatprep.mubr.f32.mxu0 0.0
    %820 = vmatmul.mubr.f32.gmra.mrb[0].mxu0 %v753
    %v821 = vpop.f32.mrb[0].mxu0
    %v822 = vadd.f32 %v750, %v821
    %v823 = vpop.f32.mrb[0].mxu0
    %824 = vdwg.mxu0
    %825 = vmax.xlane.f32.xlu0 %v822
    %v826 = vpop.xlane.xlu0 %825
    %v827 = vsub.f32 %v822, %v826
    %v828 = vmul.f32 %v827, 1.442695
    %v829 = vpow.pop %v828
    %830 = vadd.xlane.f32.xlu0 %v829
    %v831 = vpop.xlane.xlu0 %830
    %v832 = vrcp.pop %v831
    %v833 = vmul.f32 %v829, %v832
    %834 = vst [vmem:[#allocation2] sm:$0xff] %v833
    // Predicated region
    $region22: #{torch_model_forward.1} parent=1 // pred_check
      _
    $region23: #{torch_model_forward.1} parent=1 // pred_check_branch
      %836 = sbr.rel (0) target = $region25
    $region24: #{torch_model_forward.1} parent=1 // pred_region
      %s838 = ssub.s32 128, 128
      %839 = vsyncadd [#allocation3], %s838
      %s841 = sshll.u32 [#allocation2], 4
      %s842 = int_to_ptr.vmem [resolvable:$true] %s841
      %844 = dma.vmem_to_hbm [thread:$0]  %s842, 128, %s5, [#allocation3]
    $region25: #{torch_model_forward.1} parent=1 // pred_fallthru
      _
    // Predicated region
    $region26: #{torch_model_forward.1} parent=1 // pred_check
      _
    $region27: #{torch_model_forward.1} parent=1 // pred_check_branch
      %846 = sbr.rel (0) target = $region29
    $region28: #{torch_model_forward.1} parent=1 // pred_region
      %847 = dma.done [#allocation3], 128
    $region29: #{torch_model_forward.1} parent=1 // pred_fallthru
      _
    %848 = vsyncpa [#allocation3], 1

</llo_original>
